<compile_context>
chip_gen: v5e
topology: v5e:2x2
jax: 0.10.0
libtpu: 0.0.40
codegen_flags: <defaults>
</compile_context>

<pallas_src>
import functools

import jax
import jax.numpy as jnp
from jax.experimental import pallas as pl
from jax.experimental.pallas import tpu as pltpu


def _layernorm_chan_kernel(x_ref, gamma_ref, o_ref, *, eps, inv_c):
    # x_ref: (bb, C, tile_hw); gamma_ref: (1, C, 1); o_ref: (bb, C, tile_hw)
    # Pass 1: streaming sum / sum-of-squares over the channel (sublane) axis.
    x = x_ref[...].astype(jnp.float32)
    s = jnp.sum(x, axis=1, keepdims=True)
    ss = jnp.sum(x * x, axis=1, keepdims=True)
    mean = s * inv_c
    var = jnp.maximum(ss * inv_c - mean * mean, 0.0)  # guard against cancellation
    inv_std = jax.lax.rsqrt(var + eps)
    # Pass 2: re-read x and write (x - mean) * inv_std * gamma directly.
    x2 = x_ref[...].astype(jnp.float32)
    out = (x2 - mean) * inv_std * gamma_ref[...].astype(jnp.float32)
    o_ref[...] = out.astype(o_ref.dtype)


def _vmem_budget():
    """Return (max_block_bytes, vmem_limit_bytes) tuned per chip generation."""
    cap = None
    try:
        cap = pltpu.get_tpu_info().vmem_capacity_bytes
    except Exception:
        cap = None
    if cap is not None and cap >= (96 << 20):
        # v5e / v6e: 128 MiB physical VMEM -> larger blocks amortize per-step cost.
        return (6 << 20), (96 << 20)
    # v7x-class (64 MiB VMEM) or unknown: stay conservative.
    return (2 << 20), (40 << 20)


def _pick_bb(batch, row_bytes, max_block_bytes):
    """Pack multiple batch rows per block when a full (1, C, HW) row is small.

    Keeps at least 2 grid steps when batch > 1 so both v7x TensorCores get work.
    """
    if row_bytes >= max_block_bytes:
        return 1
    bb = 1
    for cand in range(1, batch + 1):
        if batch % cand == 0 and cand * row_bytes <= max_block_bytes:
            bb = cand
    if bb == batch and batch > 1:
        for cand in range(batch - 1, 0, -1):
            if batch % cand == 0:
                bb = cand
                break
    return bb


def _pick_tile_hw(hw, lane_bytes, max_block_bytes):
    """Largest lane tile that is a multiple of 128 (or the full extent) and
    keeps one block under max_block_bytes; prefers tiles that divide HW so the
    last block is unmasked / lane-dense."""
    if hw * lane_bytes <= max_block_bytes or hw <= 128:
        return int(hw)
    max_lanes = (max_block_bytes // lane_bytes) // 128 * 128
    max_lanes = int(max(128, min(max_lanes, hw)))
    # TODO(synk): for extremely wide C (C * itemsize * 128 > budget) fall back
    # to a chunked-over-C reduction (grid axis over C + pl.when init/finalize)
    # instead of accepting an oversized 128-lane block.
    for t in range(max_lanes, 127, -128):
        if hw % t == 0:
            return int(t)
    return max_lanes  # masked tail block (channel reduction is per-lane: safe)


def layernorm_chan(x, gamma, eps=1e-5):
    """x: (B, C, H, W), gamma: (1, C, 1, 1). Returns (B, C, H, W)."""
    B, C, H, W = x.shape
    HW = H * W
    itemsize = jnp.dtype(x.dtype).itemsize

    # Free reshapes only (no transpose, no pad): ideal HBM traffic is exactly
    # one read + one write of x.
    x3 = x.reshape(B, C, HW)
    gamma3 = gamma.reshape(1, C, 1)

    max_block_bytes, vmem_limit = _vmem_budget()
    bb = _pick_bb(B, C * HW * itemsize, max_block_bytes)
    if bb > 1:
        tile_hw = HW  # full spatial extent per block; batch rows fill the budget
    else:
        tile_hw = _pick_tile_hw(HW, C * itemsize, max_block_bytes)

    grid = (B // bb, pl.cdiv(HW, tile_hw))

    cost = pl.CostEstimate(
        flops=8 * x.size,
        transcendentals=B * HW,
        bytes_accessed=2 * x.size * itemsize
        + gamma.size * jnp.dtype(gamma.dtype).itemsize,
    )

    kernel = functools.partial(_layernorm_chan_kernel, eps=eps, inv_c=1.0 / C)

    out3 = pl.pallas_call(
        kernel,
        out_shape=jax.ShapeDtypeStruct((B, C, HW), x.dtype),
        grid_spec=pltpu.PrefetchScalarGridSpec(
            num_scalar_prefetch=0,
            grid=grid,
            in_specs=[
                pl.BlockSpec((bb, C, tile_hw), lambda b, j: (b, 0, j)),
                pl.BlockSpec((1, C, 1), lambda b, j: (0, 0, 0)),
            ],
            out_specs=pl.BlockSpec((bb, C, tile_hw), lambda b, j: (b, 0, j)),
        ),
        compiler_params=pltpu.CompilerParams(
            dimension_semantics=("parallel", "parallel"),
            vmem_limit_bytes=vmem_limit,
        ),
        cost_estimate=cost,
    )(x3, gamma3)

    return out3.reshape(B, C, H, W)


def _reference(x, gamma, eps=1e-5):
    mean = jnp.mean(x, axis=1, keepdims=True)
    var = jnp.mean((x - mean) ** 2, axis=1, keepdims=True)
    return (x - mean) / jnp.sqrt(var + eps) * gamma


if __name__ == "__main__":
    key = jax.random.PRNGKey(0)
    B, C, H, W = 2, 4, 16, 16
    x = jax.random.normal(key, (B, C, H, W), dtype=jnp.float32)

    # Parameter init matches nn.Parameter(torch.ones(1, dim, 1, 1)).
    gamma = jnp.ones((1, C, 1, 1), dtype=jnp.float32)

    out = layernorm_chan(x, gamma, eps=1e-5)
    out = jax.block_until_ready(out)

    ref = _reference(x, gamma, eps=1e-5)
    assert out.shape == (B, C, H, W)
    assert jnp.allclose(out, ref, atol=2e-5, rtol=2e-5)

    print("KERNEL_OK")
</pallas_src>

<mosaic_0001>
module attributes {stable_mosaic.version = 11 : i64} {
  func.func @_layernorm_chan_kernel(%arg0: i32, %arg1: i32, %arg2: memref<1x4x256xf32, #tpu.memory_space<vmem>>, %arg3: memref<1x4x1xf32, #tpu.memory_space<vmem>>, %arg4: memref<1x4x256xf32, #tpu.memory_space<vmem>>) attributes {dimension_semantics = [#tpu.dimension_semantics<parallel>, #tpu.dimension_semantics<parallel>], iteration_bounds = array<i64: 2, 1>, scalar_prefetch = 0 : i64, scratch_operands = 0 : i64, tpu.core_type = #tpu.core_type<tc>, window_params = [{transform_indices = @transform_0, window_bounds = array<i64: 1, 4, 256>}, {pipeline_mode = #tpu.pipeline_mode<synchronous>, transform_indices = @transform_1, window_bounds = array<i64: 1, 4, 1>}, {transform_indices = @transform_2, window_bounds = array<i64: 1, 4, 256>}]} {
    %c0 = arith.constant 0 : index
    %c0_0 = arith.constant 0 : index
    %c0_1 = arith.constant 0 : index
    %0 = vector.load %arg2[%c0, %c0_0, %c0_1] : memref<1x4x256xf32, #tpu.memory_space<vmem>>, vector<1x4x256xf32>
    %cst = arith.constant dense<0.000000e+00> : vector<1x256xf32>
    %1 = vector.multi_reduction <add>, %0, %cst [1] : vector<1x4x256xf32> to vector<1x256xf32>
    %2 = vector.shape_cast %1 : vector<1x256xf32> to vector<1x1x256xf32>
    %3 = arith.mulf %0, %0 : vector<1x4x256xf32>
    %cst_2 = arith.constant dense<0.000000e+00> : vector<1x256xf32>
    %4 = vector.multi_reduction <add>, %3, %cst_2 [1] : vector<1x4x256xf32> to vector<1x256xf32>
    %5 = vector.shape_cast %4 : vector<1x256xf32> to vector<1x1x256xf32>
    %cst_3 = arith.constant 2.500000e-01 : f32
    %6 = vector.broadcast %cst_3 : f32 to vector<1x1x256xf32>
    %7 = arith.mulf %2, %6 : vector<1x1x256xf32>
    %cst_4 = arith.constant 2.500000e-01 : f32
    %8 = vector.broadcast %cst_4 : f32 to vector<1x1x256xf32>
    %9 = arith.mulf %5, %8 : vector<1x1x256xf32>
    %10 = arith.mulf %7, %7 : vector<1x1x256xf32>
    %11 = arith.subf %9, %10 : vector<1x1x256xf32>
    %cst_5 = arith.constant 0.000000e+00 : f32
    %12 = vector.broadcast %cst_5 : f32 to vector<1x1x256xf32>
    %13 = arith.maximumf %11, %12 : vector<1x1x256xf32>
    %cst_6 = arith.constant 9.99999974E-6 : f32
    %14 = vector.broadcast %cst_6 : f32 to vector<1x1x256xf32>
    %15 = arith.addf %13, %14 : vector<1x1x256xf32>
    %16 = math.rsqrt %15 : vector<1x1x256xf32>
    %c0_7 = arith.constant 0 : index
    %c0_8 = arith.constant 0 : index
    %c0_9 = arith.constant 0 : index
    %17 = vector.load %arg2[%c0_7, %c0_8, %c0_9] : memref<1x4x256xf32, #tpu.memory_space<vmem>>, vector<1x4x256xf32>
    %18 = vector.broadcast %7 : vector<1x1x256xf32> to vector<1x4x256xf32>
    %19 = arith.subf %17, %18 : vector<1x4x256xf32>
    %20 = vector.broadcast %16 : vector<1x1x256xf32> to vector<1x4x256xf32>
    %21 = arith.mulf %19, %20 : vector<1x4x256xf32>
    %c0_10 = arith.constant 0 : index
    %c0_11 = arith.constant 0 : index
    %c0_12 = arith.constant 0 : index
    %22 = vector.load %arg3[%c0_10, %c0_11, %c0_12] : memref<1x4x1xf32, #tpu.memory_space<vmem>>, vector<1x4x1xf32>
    %23 = vector.broadcast %22 : vector<1x4x1xf32> to vector<1x4x256xf32>
    %24 = arith.mulf %21, %23 : vector<1x4x256xf32>
    %c0_13 = arith.constant 0 : index
    %c0_14 = arith.constant 0 : index
    %c0_15 = arith.constant 0 : index
    %25 = vector.load %arg4[%c0_13, %c0_14, %c0_15] : memref<1x4x256xf32, #tpu.memory_space<vmem>>, vector<1x4x256xf32>
    tpu.vector_store %arg4[%c0_13, %c0_14, %c0_15], %24 {strides = array<i32>} : memref<1x4x256xf32, #tpu.memory_space<vmem>>, vector<1x4x256xf32>,
    return
  }
  func.func @transform_0(%arg0: i32, %arg1: i32) -> (i32, i32, i32) {
    %c0_i32 = arith.constant 0 : i32
    %c0_i32_0 = arith.constant 0 : i32
    return %arg0, %c0_i32, %arg1 : i32, i32, i32
  }
  func.func @transform_1(%arg0: i32, %arg1: i32) -> (i32, i32, i32) {
    %c0_i32 = arith.constant 0 : i32
    %c0_i32_0 = arith.constant 0 : i32
    %c0_i32_1 = arith.constant 0 : i32
    %c0_i32_2 = arith.constant 0 : i32
    return %c0_i32, %c0_i32_0, %c0_i32_1 : i32, i32, i32
  }
  func.func @transform_2(%arg0: i32, %arg1: i32) -> (i32, i32, i32) {
    %c0_i32 = arith.constant 0 : i32
    %c0_i32_0 = arith.constant 0 : i32
    return %arg0, %c0_i32, %arg1 : i32, i32, i32
  }
}

</mosaic_0001>

<llo_original>
// kernel: tpu_custom_call.1
$region0: #{tpu_custom_call.1}
  #allocation0 [shape = 'u32[]', space=smem, size = 0x4, offset = 0x4, fixed_abs, tag = 'smem constant byte address 0x4 - core index']
  #allocation1 [shape = 'u32[72,128]{1,0:T(1,128)}', space=vmem, size = 0x9000, scoped, tag = 'internal scratch']
  %s0 = inlined_call_operand.hbm [shape: f32[2,4,256], index: 0, kind: input, shape index: {}]
  %s1 = inlined_call_operand.vmem [shape: f32[1,4,1], index: 1, kind: input, shape index: {}]
  %s2 = inlined_call_operand.hbm [shape: f32[2,4,256], index: 2, kind: output, shape index: {}]
  %s3 = sld [smem:[#allocation0]]
  $region45: #{tpu_custom_call.1} parent=0
    _
  %s5 = ssub.s32 1, %s3
  %s6 = scalar_select 0, %s5, %s3
  $region1: #{tpu_custom_call.1} parent=0
    #allocation2 [shape = 'u8[8192]{0}', space=vmem, size = 0x2000, scoped, tag = 'input window, operand 0']
    #allocation3 [shape = 's32[2]{0}', space=sflag, size = 0x8, scoped, tag = 'scoped memory for tpu_custom_call.1']
    #allocation4 [shape = 's32[2]{0}', space=sflag, size = 0x8, scoped, tag = 'scoped memory for tpu_custom_call.1']
    #allocation5 [shape = 'u8[8192]{0}', space=vmem, size = 0x2000, scoped, tag = 'output window, operand 0']
    %7 = vsyncpa [#allocation3], 0
    %s8 = scalar_lea.sflag [#allocation3], 1
    %9 = vsyncpa %s8, 0
    %10 = vsyncpa [#allocation4], 0
    %s11 = scalar_lea.sflag [#allocation4], 1
    %12 = vsyncpa %s11, 0
    loop: start=0, step=1, limit=4
    $region2: #{tpu_custom_call.1} parent=1 // loop_pre_header
      _
    $region3: #{tpu_custom_call.1} parent=1 // loop_header
      %s14 = sphi 0, %s18
      %p15 = scmp.ge.s32.totalorder %s14, 4
      %s21 = sphi 0, %s33
      %s22 = sphi 0, %s29
      %s23 = sphi 0, %s21
      %s24 = sphi 0, %s22
      %s25 = sphi 0, %s23
      %s26 = sphi 0, %s24
      %s38 = sphi 0, %s40
      %s41 = sphi 0, %s38
      %s42 = sphi 0, %s41
      %s58 = sphi 0, %s42
      %s62 = sphi 0, %s62
      %s64 = sphi 0, %s62
      %s65 = sphi 0, %s64
      %s79 = sphi 0, %s65
      %s87 = sphi 0, %s89
      %s90 = sphi 0, %s87
      %s91 = sphi 0, %s90
      %s107 = sphi 0, %s91
    $region4: #{tpu_custom_call.1} parent=1 // loop_header_branch
      %17 = sbr.rel (%p15) target = $region8
    $region5: #{tpu_custom_call.1} parent=1 // loop_body
      %s19 = ssub.s32 %s14, 1
      %s20 = ssub.s32 %s14, 2
      %s27 = sadd.s32 1, %s22
      %p28 = scmp.ge.s32.totalorder %s27, 1
      %s29 = scalar_select %p28, 0, %s27
      %s30 = sadd.s32 1, %s21
      %s31 = scalar_select %p28, %s30, %s21
      %p32 = scmp.ge.s32.totalorder %s31, 2
      %s33 = scalar_select %p32, 0, %s31
      %s34 = ssub.s32 %s21, %s33
      %s35 = ssub.s32 %s22, %s29
      %s36 = sor.u32 %s34, %s35
      %p37 = scmp.eq.s32.totalorder %s36, 0
      %s39 = sadd.s32 %s38, 1
      %s40 = scalar_select %p37, %s38, %s39
      %p43 = pneg %p37
      %p44 = scmp.eq.s32.totalorder %s14, 1
      %p45 = por %p43, %p44
      %p46 = scmp.ne.s32.totalorder %s38, %s41
      %p47 = scmp.eq.s32.totalorder %s14, 0
      %p48 = por %p46, %p47
      %p49 = scmp.ne.s32.totalorder %s38, %s41
      %p50 = scmp.eq.s32.totalorder %s19, 1
      %p51 = por %p49, %p50
      %p52 = scmp.ne.s32.totalorder %s41, %s42
      %p53 = scmp.eq.s32.totalorder %s19, 0
      %p54 = por %p52, %p53
      %p55 = scmp.ne.s32.totalorder %s41, %s42
      %p56 = scmp.eq.s32.totalorder %s20, 1
      %p57 = por %p55, %p56
      %p59 = scmp.ne.s32.totalorder %s42, %s58
      %p60 = scmp.eq.s32.totalorder %s20, 0
      %p61 = por %p59, %p60
      %s63 = sadd.s32 %s62, 1
      %p66 = scmp.eq.s32.totalorder %s14, 1
      %p67 = scmp.ne.s32.totalorder %s62, %s64
      %p68 = scmp.eq.s32.totalorder %s14, 0
      %p69 = por %p67, %p68
      %p70 = scmp.ne.s32.totalorder %s62, %s64
      %p71 = scmp.eq.s32.totalorder %s19, 1
      %p72 = por %p70, %p71
      %p73 = scmp.ne.s32.totalorder %s64, %s65
      %p74 = scmp.eq.s32.totalorder %s19, 0
      %p75 = por %p73, %p74
      %p76 = scmp.ne.s32.totalorder %s64, %s65
      %p77 = scmp.eq.s32.totalorder %s20, 1
      %p78 = por %p76, %p77
      %p80 = scmp.ne.s32.totalorder %s65, %s79
      %p81 = scmp.eq.s32.totalorder %s20, 0
      %p82 = por %p80, %p81
      %s83 = ssub.s32 %s21, %s33
      %s84 = ssub.s32 %s22, %s29
      %s85 = sor.u32 %s83, %s84
      %p86 = scmp.eq.s32.totalorder %s85, 0
      %s88 = sadd.s32 %s87, 1
      %s89 = scalar_select %p86, %s87, %s88
      %p92 = pneg %p86
      %p93 = scmp.eq.s32.totalorder %s14, 1
      %p94 = por %p92, %p93
      %p95 = scmp.ne.s32.totalorder %s87, %s90
      %p96 = scmp.eq.s32.totalorder %s14, 0
      %p97 = por %p95, %p96
      %p98 = scmp.ne.s32.totalorder %s87, %s90
      %p99 = scmp.eq.s32.totalorder %s19, 1
      %p100 = por %p98, %p99
      %p101 = scmp.ne.s32.totalorder %s90, %s91
      %p102 = scmp.eq.s32.totalorder %s19, 0
      %p103 = por %p101, %p102
      %p104 = scmp.ne.s32.totalorder %s90, %s91
      %p105 = scmp.eq.s32.totalorder %s20, 1
      %p106 = por %p104, %p105
      %p108 = scmp.ne.s32.totalorder %s91, %s107
      %p109 = scmp.eq.s32.totalorder %s20, 0
      %p110 = por %p108, %p109
      %p111 = scmp.le.s32.totalorder 1, %s14
      %p112 = scmp.lt.s32.totalorder %s14, 3
      %p113 = pnand %p111, %p112
      %p114 = pneg %p113
      // Predicated region
      $region9: #{tpu_custom_call.1} parent=5 // pred_check
        _
      $region10: #{tpu_custom_call.1} parent=5 // pred_check_branch
        %116 = sbr.rel (%p113) target = $region12
      $region11: #{tpu_custom_call.1} parent=5 // pred_region
        %s117 = ssub.s32 %s14, 1
        // Predicated region
        $region13: #{tpu_custom_call.1} parent=11 // pred_check
          %p118 = pneg %p75
        $region14: #{tpu_custom_call.1} parent=11 // pred_check_branch
          %120 = sbr.rel (%p118) target = $region16
        $region15: #{tpu_custom_call.1} parent=11 // pred_region
          _
        $region16: #{tpu_custom_call.1} parent=11 // pred_fallthru
          _
      $region12: #{tpu_custom_call.1} parent=5 // pred_fallthru
        _
      %p121 = scmp.lt.s32.totalorder %s14, 2
      // Predicated region
      $region17: #{tpu_custom_call.1} parent=5 // pred_check
        %p122 = pneg %p121
      $region18: #{tpu_custom_call.1} parent=5 // pred_check_branch
        %124 = sbr.rel (%p122) target = $region20
      $region19: #{tpu_custom_call.1} parent=5 // pred_region
        // Predicated region
        $region21: #{tpu_custom_call.1} parent=19 // pred_check
          %p125 = pneg %p48
        $region22: #{tpu_custom_call.1} parent=19 // pred_check_branch
          %127 = sbr.rel (%p125) target = $region24
        $region23: #{tpu_custom_call.1} parent=19 // pred_region
          %s128 = sand.u32 %s38, 1
          %s129 = scalar_lea.sflag [#allocation3], %s128
          %s130 = sand.u32 %s38, 1
          %s131 = smul.addr %s130, 8
          %s132 = scalar_lea.vmem [#allocation2], %s131
          %s133 = smul.u32 2, %s22
          %135 = vsyncadd %s129, 0
          %s136 = smul.addr %s21, 2
          %s137 = sadd.s32 %s133, %s136
          %s138 = smul.addr %s137, 4
          %s139 = scalar_lea.hbm %s0, %s138
          %s141 = sshll.u32 %s139, 4
          %s142 = int_to_ptr.hbm [resolvable:$true] %s141
          %s143 = sshll.u32 %s132, 4
          %s144 = int_to_ptr.vmem [resolvable:$true] %s143
          %146 = dma.hbm_to_vmem [thread:$0]  %s142, 128, %s144, %s129
        $region24: #{tpu_custom_call.1} parent=19 // pred_fallthru
          _
      $region20: #{tpu_custom_call.1} parent=5 // pred_fallthru
        _
      %p147 = scmp.le.s32.totalorder 1, %s14
      %p148 = scmp.lt.s32.totalorder %s14, 3
      %p149 = pnand %p147, %p148
      %p150 = pneg %p149
      // Predicated region
      $region25: #{tpu_custom_call.1} parent=5 // pred_check
        _
      $region26: #{tpu_custom_call.1} parent=5 // pred_check_branch
        %152 = sbr.rel (%p149) target = $region28
      $region27: #{tpu_custom_call.1} parent=5 // pred_region
        %s153 = ssub.s32 %s14, 1
        %s154 = sand.u32 %s41, 1
        %s155 = scalar_lea.sflag [#allocation3], %s154
        %s156 = sand.u32 %s41, 1
        %s157 = smul.addr %s156, 8
        %s158 = scalar_lea.vmem [#allocation2], %s157
        // Predicated region
        $region29: #{tpu_custom_call.1} parent=27 // pred_check
          %p159 = pneg %p54
        $region30: #{tpu_custom_call.1} parent=27 // pred_check_branch
          %161 = sbr.rel (%p159) target = $region32
        $region31: #{tpu_custom_call.1} parent=27 // pred_region
          %163 = dma.done %s155, 128
        $region32: #{tpu_custom_call.1} parent=27 // pred_fallthru
          _
        %s164 = sand.u32 %s41, 1
        %s165 = scalar_lea.sflag [#allocation3], %s164
        %s166 = sand.u32 %s41, 1
        %s167 = smul.addr %s166, 8
        %s168 = scalar_lea.vmem [#allocation2], %s167
        %p169 = pneg %p54
        %p170 = pneg %p51
        %p171 = pneg %p75
        %p172 = pneg %p72
        %p173 = pneg %p103
        %p174 = pneg %p100
        %s175 = sand.u32 %s90, 1
        %s176 = scalar_lea.sflag [#allocation4], %s175
        %s177 = sand.u32 %s90, 1
        %s178 = smul.addr %s177, 8
        %s179 = scalar_lea.vmem [#allocation5], %s178
        %s180 = smul.u32 2, %s24
        %s181 = smul.u32 2, %s24
        %v182 = vld [vmem:[%s158] sm:$0xff]
        %184 = vst [vmem:[#allocation1] ss:$2 sm:$0xff] %v182
        %v185 = vld.sshfl [vmem:[#allocation1] sm:$0xff pattern:$0x75316420]
        %v186 = vld.sshfl [vmem:[#allocation1 + $0x8] sm:$0xff pattern:$0x75316420]
        %vm189 = vcmask 1043456
        %v190 = vsel %vm189, %v185, 0.0
        %v191 = vrot.slane %v190, 4
        %v192 = vadd.f32 %v190, %v191
        %v193 = vrot.slane %v192, 2
        %v194 = vadd.f32 %v192, %v193
        %v195 = vrot.slane %v194, 1
        %v196 = vadd.f32 %v194, %v195
        %v197 = vsel %vm189, %v186, 0.0
        %v198 = vrot.slane %v197, 4
        %v199 = vadd.f32 %v197, %v198
        %v200 = vrot.slane %v199, 2
        %v201 = vadd.f32 %v199, %v200
        %v202 = vrot.slane %v201, 1
        %v203 = vadd.f32 %v201, %v202
        %v204 = vmul.f32 %v182, %v182
        %206 = vst [vmem:[#allocation1] ss:$2 sm:$0xff] %v204
        %v207 = vld.sshfl [vmem:[#allocation1] sm:$0xff pattern:$0x75316420]
        %v208 = vld.sshfl [vmem:[#allocation1 + $0x8] sm:$0xff pattern:$0x75316420]
        %v211 = vsel %vm189, %v207, 0.0
        %v212 = vrot.slane %v211, 4
        %v213 = vadd.f32 %v211, %v212
        %v214 = vrot.slane %v213, 2
        %v215 = vadd.f32 %v213, %v214
        %v216 = vrot.slane %v215, 1
        %v217 = vadd.f32 %v215, %v216
        %v218 = vsel %vm189, %v208, 0.0
        %v219 = vrot.slane %v218, 4
        %v220 = vadd.f32 %v218, %v219
        %v221 = vrot.slane %v220, 2
        %v222 = vadd.f32 %v220, %v221
        %v223 = vrot.slane %v222, 1
        %v224 = vadd.f32 %v222, %v223
        %v225 = vmul.f32 %v196, 0.25
        %v226 = vmul.f32 %v203, 0.25
        %v227 = vmul.f32 %v217, 0.25
        %v228 = vmul.f32 %v224, 0.25
        %v229 = vmul.f32 %v225, %v225
        %v230 = vmul.f32 %v226, %v226
        %v231 = vsub.f32 %v227, %v229
        %v232 = vsub.f32 %v228, %v230
        %v233 = vmax.f32 %v231, 0.0
        %v234 = vmax.f32 %v232, 0.0
        %v235 = vadd.f32 %v233, 1e-05
        %v236 = vadd.f32 %v234, 1e-05
        %v237 = vrsqrt.pop %v235
        %v238 = vmul.f32 %v237, %v235
        %v239 = vmul.f32 %v238, %v237
        %v240 = vmul.f32 0.5, %v239
        %v241 = vsub.f32 1.5, %v240
        %v242 = vmul.f32 %v237, %v241
        %vm243 = vweird.f32 %v235
        %vm244 = vweird.f32 %v237
        %vm245 = vmor %vm243, %vm244
        %v246 = vsel %vm245, %v237, %v242
        %v247 = vrsqrt.pop %v236
        %v248 = vmul.f32 %v247, %v236
        %v249 = vmul.f32 %v248, %v247
        %v250 = vmul.f32 0.5, %v249
        %v251 = vsub.f32 1.5, %v250
        %v252 = vmul.f32 %v247, %v251
        %vm253 = vweird.f32 %v236
        %vm254 = vweird.f32 %v247
        %vm255 = vmor %vm253, %vm254
        %v256 = vsel %vm255, %v247, %v252
        %v259 = vrot.slane %v226, 4
        %v260 = vsel %vm189, %v225, %v259
        %v262 = vsub.f32 %v182, %v260
        %v265 = vrot.slane %v256, 4
        %v266 = vsel %vm189, %v246, %v265
        %v268 = vmul.f32 %v262, %v266
        %v269 = vld [vmem:[%s1] sm:$0xf]
        %271 = vset.pattern.permute.xlu0 0
        %272 = vperm.xlu0 %271, %v269
        %v273 = vpop.permute.xlu0 %272
        %v275 = vunpack.c.l.s4 839922192
        %v276 = vunpack.c.0.s8 %v275
        %v277 = vperm.slane %v273, %v276
        %v279 = vmul.f32 %v268, %v277
        %280 = vst [vmem:[%s179] sm:$0xff] %v279
        %s281 = sand.u32 %s90, 1
        %s282 = scalar_lea.sflag [#allocation4], %s281
        %s283 = sand.u32 %s90, 1
        %s284 = smul.addr %s283, 8
        %s285 = scalar_lea.vmem [#allocation5], %s284
        // Predicated region
        $region33: #{tpu_custom_call.1} parent=27 // pred_check
          %p286 = pneg %p100
        $region34: #{tpu_custom_call.1} parent=27 // pred_check_branch
          %288 = sbr.rel (%p286) target = $region36
        $region35: #{tpu_custom_call.1} parent=27 // pred_region
          %s289 = smul.u32 2, %s24
          %291 = vsyncadd %s282, 0
          %s292 = smul.addr %s23, 2
          %s293 = sadd.s32 %s289, %s292
          %s294 = smul.addr %s293, 4
          %s295 = scalar_lea.hbm %s2, %s294
          %s297 = sshll.u32 %s285, 4
          %s298 = int_to_ptr.vmem [resolvable:$true] %s297
          %s299 = sshll.u32 %s295, 4
          %s300 = int_to_ptr.hbm [resolvable:$true] %s299
          %302 = dma.vmem_to_hbm [thread:$0]  %s298, 128, %s300, %s282
        $region36: #{tpu_custom_call.1} parent=27 // pred_fallthru
          _
      $region28: #{tpu_custom_call.1} parent=5 // pred_fallthru
        _
      %p303 = scmp.le.s32.totalorder 2, %s14
      // Predicated region
      $region37: #{tpu_custom_call.1} parent=5 // pred_check
        %p304 = pneg %p303
      $region38: #{tpu_custom_call.1} parent=5 // pred_check_branch
        %306 = sbr.rel (%p304) target = $region40
      $region39: #{tpu_custom_call.1} parent=5 // pred_region
        %s307 = ssub.s32 %s14, 2
        // Predicated region
        $region41: #{tpu_custom_call.1} parent=39 // pred_check
          %p308 = pneg %p106
        $region42: #{tpu_custom_call.1} parent=39 // pred_check_branch
          %310 = sbr.rel (%p308) target = $region44
        $region43: #{tpu_custom_call.1} parent=39 // pred_region
          %s311 = sand.u32 %s91, 1
          %s312 = scalar_lea.sflag [#allocation4], %s311
          %s313 = sand.u32 %s91, 1
          %s314 = smul.addr %s313, 8
          %s315 = scalar_lea.vmem [#allocation5], %s314
          %317 = dma.done %s312, 128
        $region44: #{tpu_custom_call.1} parent=39 // pred_fallthru
          _
      $region40: #{tpu_custom_call.1} parent=5 // pred_fallthru
        _
    $region6: #{tpu_custom_call.1} parent=1 // loop_footer
      %s18 = sadd.s32 1, %s14
    $region7: #{tpu_custom_call.1} parent=1 // loop_footer_branch
      %13 = sbr.rel target = $region3
    $region8: #{tpu_custom_call.1} parent=1 // loop_exit
      _
    %318 = vsyncpa [#allocation3], 1
    %s319 = scalar_lea.sflag [#allocation3], 1
    %320 = vsyncpa %s319, 1
    %321 = vsyncpa [#allocation4], 1
    %s322 = scalar_lea.sflag [#allocation4], 1
    %323 = vsyncpa %s322, 1

</llo_original>
